<compile_context>
chip_gen: v5e
topology: v5e:2x2
jax: 0.10.0
libtpu: 0.0.40
codegen_flags: <defaults>
</compile_context>

<pallas_src>
import functools
import math

import jax
import jax.numpy as jnp
from jax.experimental import pallas as pl
from jax.experimental.pallas import tpu as pltpu


def _mha_kernel(q_ref, k_ref, v_ref, mask_ref,
                wq_ref, bq_ref, wk_ref, bk_ref, wv_ref, bv_ref,
                wo_ref, bo_ref, out_ref, *, num_heads):
    """Fused multi-head attention for one batch element.

    Block shapes (leading batch dim of 1):
      q_ref/k_ref/v_ref : (1, S, D)    mask_ref : (1, S, S)
      w*_ref            : (D, D)       b*_ref   : (1, D)
      out_ref           : (1, S, D)
    """
    _, _, d_model = q_ref.shape
    d_k = d_model // num_heads
    inv_sqrt_dk = 1.0 / math.sqrt(d_k)
    neg_inf = jnp.float32(-1e9)

    xq = q_ref[0]                                   # (S, D)
    xk = k_ref[0]
    xv = v_ref[0]
    mask_is_zero = mask_ref[0] == 0.0               # (S, S), hoisted out of head loop

    # Input projections x @ W + b, f32 accumulation on the MXU.
    q = jnp.dot(xq, wq_ref[...], preferred_element_type=jnp.float32) + bq_ref[...]
    k = jnp.dot(xk, wk_ref[...], preferred_element_type=jnp.float32) + bk_ref[...]
    v = jnp.dot(xv, wv_ref[...], preferred_element_type=jnp.float32) + bv_ref[...]

    # Per-head attention; heads are static lane slices of the projected features.
    ctx_parts = []
    for hh in range(num_heads):
        lo = hh * d_k
        qh = q[:, lo:lo + d_k]                      # (S, d_k)
        kh = k[:, lo:lo + d_k]
        vh = v[:, lo:lo + d_k]

        # scores = qh @ kh.T / sqrt(d_k)            -> (S, S)
        scores = jax.lax.dot_general(
            qh, kh, (((1,), (1,)), ((), ())),
            preferred_element_type=jnp.float32) * inv_sqrt_dk
        scores = jnp.where(mask_is_zero, neg_inf, scores)

        # Numerically-stable softmax over keys.
        s_max = jnp.max(scores, axis=-1, keepdims=True)
        e = jnp.exp(scores - s_max)
        p_attn = e / jnp.sum(e, axis=-1, keepdims=True)
        # TODO(synk): nn.Dropout(p=0.1) on p_attn omitted (eval-mode forward).

        ctx_parts.append(
            jnp.dot(p_attn, vh, preferred_element_type=jnp.float32))

    ctx = jnp.concatenate(ctx_parts, axis=-1)       # (S, D) — heads re-merged
    out = jnp.dot(ctx, wo_ref[...], preferred_element_type=jnp.float32) + bo_ref[...]
    out_ref[0] = out.astype(out_ref.dtype)          # single lane-dense store


def multi_headed_attention(query, key, value, params, *, num_heads, mask=None):
    """Pallas equivalent of MultiHeadedAttention(h, d_model)(query, key, value, mask).

    Args:
      query/key/value: f32[B, S, d_model].
      params: (W_q, b_q, W_k, b_k, W_v, b_v, W_o, b_o) with W: [d_model, d_model]
              (stored input-major so y = x @ W + b), b: [d_model].
      num_heads: number of attention heads h (d_model % h == 0).
      mask: optional [B, S, S] (or broadcastable) — 0 means "masked out".
    Returns:
      f32[B, S, d_model].
    """
    wq, bq, wk, bk, wv, bv, wo, bo = params
    b, s_len, d_model = query.shape
    assert d_model % num_heads == 0, "d_model must be divisible by num_heads"

    if mask is None:
        mask = jnp.ones((b, s_len, s_len), jnp.float32)
    else:
        mask = jnp.broadcast_to(mask.astype(jnp.float32), (b, s_len, s_len))

    def row(bias):
        return bias.astype(jnp.float32).reshape(1, d_model)

    x_spec = pl.BlockSpec((1, s_len, d_model), lambda i: (i, 0, 0))
    m_spec = pl.BlockSpec((1, s_len, s_len), lambda i: (i, 0, 0))
    w_spec = pl.BlockSpec((d_model, d_model), lambda i: (0, 0))
    b_spec = pl.BlockSpec((1, d_model), lambda i: (0, 0))

    kernel = functools.partial(_mha_kernel, num_heads=num_heads)
    return pl.pallas_call(
        kernel,
        out_shape=jax.ShapeDtypeStruct((b, s_len, d_model), jnp.float32),
        grid=(b,),
        in_specs=[x_spec, x_spec, x_spec, m_spec,
                  w_spec, b_spec, w_spec, b_spec, w_spec, b_spec,
                  w_spec, b_spec],
        out_specs=x_spec,
        compiler_params=pltpu.CompilerParams(
            dimension_semantics=("parallel",)),
    )(query.astype(jnp.float32), key.astype(jnp.float32),
      value.astype(jnp.float32), mask,
      wq, row(bq), wk, row(bk), wv, row(bv), wo, row(bo))


def _reference(query, key, value, params, *, num_heads, mask=None):
    """Pure-JAX reference mirroring the PyTorch forward (dropout disabled)."""
    wq, bq, wk, bk, wv, bv, wo, bo = params
    b, s_len, d_model = query.shape
    d_k = d_model // num_heads

    def split_heads(x):
        return x.reshape(b, s_len, num_heads, d_k).transpose(0, 2, 1, 3)

    q = split_heads(query @ wq + bq)
    k = split_heads(key @ wk + bk)
    v = split_heads(value @ wv + bv)

    scores = jnp.einsum("bhqd,bhkd->bhqk", q, k) / math.sqrt(d_k)
    if mask is not None:
        scores = jnp.where(mask[:, None, :, :] == 0, -1e9, scores)
    p = jax.nn.softmax(scores, axis=-1)
    ctx = jnp.einsum("bhqk,bhkd->bhqd", p, v)
    ctx = ctx.transpose(0, 2, 1, 3).reshape(b, s_len, d_model)
    return ctx @ wo + bo


if __name__ == "__main__":
    key = jax.random.PRNGKey(0)
    B, S, D, H = 2, 8, 32, 4   # batch, seq, d_model, heads (d_k = 8)

    keys = jax.random.split(key, 12)
    lim = 1.0 / math.sqrt(D)

    def linear_params(kw, kb):
        w = jax.random.uniform(kw, (D, D), jnp.float32, minval=-lim, maxval=lim)
        bvec = jax.random.uniform(kb, (D,), jnp.float32, minval=-lim, maxval=lim)
        return w, bvec

    wq, bq = linear_params(keys[0], keys[1])
    wk, bk = linear_params(keys[2], keys[3])
    wv, bv = linear_params(keys[4], keys[5])
    wo, bo = linear_params(keys[6], keys[7])
    params = (wq, bq, wk, bk, wv, bv, wo, bo)

    q = jax.random.normal(keys[8], (B, S, D), jnp.float32)
    k = jax.random.normal(keys[9], (B, S, D), jnp.float32)
    v = jax.random.normal(keys[10], (B, S, D), jnp.float32)

    # Deterministic causal-style mask (1 = attend, 0 = masked), shape (B, S, S).
    mask = jnp.broadcast_to(jnp.tril(jnp.ones((S, S), jnp.float32)), (B, S, S))

    out = multi_headed_attention(q, k, v, params, num_heads=H, mask=mask)
    out = jax.block_until_ready(out)

    ref = _reference(q, k, v, params, num_heads=H, mask=mask)
    assert out.shape == (B, S, D)
    err = float(jnp.max(jnp.abs(out - ref)))
    assert jnp.allclose(out, ref, atol=2e-3, rtol=2e-3), (
        f"mismatch vs reference, max abs err = {err}")

    print("KERNEL_OK")
</pallas_src>

<mosaic_0001>
module attributes {stable_mosaic.version = 11 : i64} {
  func.func @_mha_kernel(%arg0: i32, %arg1: memref<1x8x32xf32, #tpu.memory_space<vmem>>, %arg2: memref<1x8x32xf32, #tpu.memory_space<vmem>>, %arg3: memref<1x8x32xf32, #tpu.memory_space<vmem>>, %arg4: memref<1x8x8xf32, #tpu.memory_space<vmem>>, %arg5: memref<32x32xf32, #tpu.memory_space<vmem>>, %arg6: memref<1x32xf32, #tpu.memory_space<vmem>>, %arg7: memref<32x32xf32, #tpu.memory_space<vmem>>, %arg8: memref<1x32xf32, #tpu.memory_space<vmem>>, %arg9: memref<32x32xf32, #tpu.memory_space<vmem>>, %arg10: memref<1x32xf32, #tpu.memory_space<vmem>>, %arg11: memref<32x32xf32, #tpu.memory_space<vmem>>, %arg12: memref<1x32xf32, #tpu.memory_space<vmem>>, %arg13: memref<1x8x32xf32, #tpu.memory_space<vmem>>) attributes {dimension_semantics = [#tpu.dimension_semantics<parallel>], iteration_bounds = array<i64: 2>, scalar_prefetch = 0 : i64, scratch_operands = 0 : i64, tpu.core_type = #tpu.core_type<tc>, window_params = [{transform_indices = @transform_0, window_bounds = array<i64: 1, 8, 32>}, {transform_indices = @transform_1, window_bounds = array<i64: 1, 8, 32>}, {transform_indices = @transform_2, window_bounds = array<i64: 1, 8, 32>}, {transform_indices = @transform_3, window_bounds = array<i64: 1, 8, 8>}, {pipeline_mode = #tpu.pipeline_mode<synchronous>, transform_indices = @transform_4, window_bounds = array<i64: 32, 32>}, {pipeline_mode = #tpu.pipeline_mode<synchronous>, transform_indices = @transform_5, window_bounds = array<i64: 1, 32>}, {pipeline_mode = #tpu.pipeline_mode<synchronous>, transform_indices = @transform_6, window_bounds = array<i64: 32, 32>}, {pipeline_mode = #tpu.pipeline_mode<synchronous>, transform_indices = @transform_7, window_bounds = array<i64: 1, 32>}, {pipeline_mode = #tpu.pipeline_mode<synchronous>, transform_indices = @transform_8, window_bounds = array<i64: 32, 32>}, {pipeline_mode = #tpu.pipeline_mode<synchronous>, transform_indices = @transform_9, window_bounds = array<i64: 1, 32>}, {pipeline_mode = #tpu.pipeline_mode<synchronous>, transform_indices = @transform_10, window_bounds = array<i64: 32, 32>}, {pipeline_mode = #tpu.pipeline_mode<synchronous>, transform_indices = @transform_11, window_bounds = array<i64: 1, 32>}, {transform_indices = @transform_12, window_bounds = array<i64: 1, 8, 32>}]} {
    %c0 = arith.constant 0 : index
    %c0_0 = arith.constant 0 : index
    %c0_1 = arith.constant 0 : index
    %0 = vector.load %arg1[%c0, %c0_0, %c0_1] : memref<1x8x32xf32, #tpu.memory_space<vmem>>, vector<1x8x32xf32>
    %1 = vector.shape_cast %0 : vector<1x8x32xf32> to vector<8x32xf32>
    %c0_2 = arith.constant 0 : index
    %c0_3 = arith.constant 0 : index
    %c0_4 = arith.constant 0 : index
    %2 = vector.load %arg2[%c0_2, %c0_3, %c0_4] : memref<1x8x32xf32, #tpu.memory_space<vmem>>, vector<1x8x32xf32>
    %3 = vector.shape_cast %2 : vector<1x8x32xf32> to vector<8x32xf32>
    %c0_5 = arith.constant 0 : index
    %c0_6 = arith.constant 0 : index
    %c0_7 = arith.constant 0 : index
    %4 = vector.load %arg3[%c0_5, %c0_6, %c0_7] : memref<1x8x32xf32, #tpu.memory_space<vmem>>, vector<1x8x32xf32>
    %5 = vector.shape_cast %4 : vector<1x8x32xf32> to vector<8x32xf32>
    %c0_8 = arith.constant 0 : index
    %c0_9 = arith.constant 0 : index
    %c0_10 = arith.constant 0 : index
    %6 = vector.load %arg4[%c0_8, %c0_9, %c0_10] : memref<1x8x8xf32, #tpu.memory_space<vmem>>, vector<1x8x8xf32>
    %7 = vector.shape_cast %6 : vector<1x8x8xf32> to vector<8x8xf32>
    %cst = arith.constant 0.000000e+00 : f32
    %8 = vector.broadcast %cst : f32 to vector<8x8xf32>
    %9 = arith.cmpf oeq, %7, %8 : vector<8x8xf32>
    %c0_11 = arith.constant 0 : index
    %c0_12 = arith.constant 0 : index
    %10 = vector.load %arg5[%c0_11, %c0_12] : memref<32x32xf32, #tpu.memory_space<vmem>>, vector<32x32xf32>
    %cst_13 = arith.constant dense<0.000000e+00> : vector<8x32xf32>
    %11 = tpu.matmul %1, %10, %cst_13 {dimension_numbers = #tpu.dot_dimension_numbers<[1], [0], [0], [1], [0, 0, 1, 1], [], []>} : vector<8x32xf32>, vector<32x32xf32>, vector<8x32xf32> -> vector<8x32xf32>
    %c0_14 = arith.constant 0 : index
    %c0_15 = arith.constant 0 : index
    %12 = vector.load %arg6[%c0_14, %c0_15] : memref<1x32xf32, #tpu.memory_space<vmem>>, vector<1x32xf32>
    %13 = vector.broadcast %12 : vector<1x32xf32> to vector<8x32xf32>
    %14 = arith.addf %11, %13 : vector<8x32xf32>
    %c0_16 = arith.constant 0 : index
    %c0_17 = arith.constant 0 : index
    %15 = vector.load %arg7[%c0_16, %c0_17] : memref<32x32xf32, #tpu.memory_space<vmem>>, vector<32x32xf32>
    %cst_18 = arith.constant dense<0.000000e+00> : vector<8x32xf32>
    %16 = tpu.matmul %3, %15, %cst_18 {dimension_numbers = #tpu.dot_dimension_numbers<[1], [0], [0], [1], [0, 0, 1, 1], [], []>} : vector<8x32xf32>, vector<32x32xf32>, vector<8x32xf32> -> vector<8x32xf32>
    %c0_19 = arith.constant 0 : index
    %c0_20 = arith.constant 0 : index
    %17 = vector.load %arg8[%c0_19, %c0_20] : memref<1x32xf32, #tpu.memory_space<vmem>>, vector<1x32xf32>
    %18 = vector.broadcast %17 : vector<1x32xf32> to vector<8x32xf32>
    %19 = arith.addf %16, %18 : vector<8x32xf32>
    %c0_21 = arith.constant 0 : index
    %c0_22 = arith.constant 0 : index
    %20 = vector.load %arg9[%c0_21, %c0_22] : memref<32x32xf32, #tpu.memory_space<vmem>>, vector<32x32xf32>
    %cst_23 = arith.constant dense<0.000000e+00> : vector<8x32xf32>
    %21 = tpu.matmul %5, %20, %cst_23 {dimension_numbers = #tpu.dot_dimension_numbers<[1], [0], [0], [1], [0, 0, 1, 1], [], []>} : vector<8x32xf32>, vector<32x32xf32>, vector<8x32xf32> -> vector<8x32xf32>
    %c0_24 = arith.constant 0 : index
    %c0_25 = arith.constant 0 : index
    %22 = vector.load %arg10[%c0_24, %c0_25] : memref<1x32xf32, #tpu.memory_space<vmem>>, vector<1x32xf32>
    %23 = vector.broadcast %22 : vector<1x32xf32> to vector<8x32xf32>
    %24 = arith.addf %21, %23 : vector<8x32xf32>
    %25 = vector.extract_strided_slice %14 {offsets = [0, 0], sizes = [8, 8], strides = [1, 1]} : vector<8x32xf32> to vector<8x8xf32>
    %26 = vector.extract_strided_slice %19 {offsets = [0, 0], sizes = [8, 8], strides = [1, 1]} : vector<8x32xf32> to vector<8x8xf32>
    %27 = vector.extract_strided_slice %24 {offsets = [0, 0], sizes = [8, 8], strides = [1, 1]} : vector<8x32xf32> to vector<8x8xf32>
    %cst_26 = arith.constant dense<0.000000e+00> : vector<8x8xf32>
    %28 = tpu.matmul %25, %26, %cst_26 {dimension_numbers = #tpu.dot_dimension_numbers<[1], [1], [0], [0], [0, 0, 1, 0], [], []>} : vector<8x8xf32>, vector<8x8xf32>, vector<8x8xf32> -> vector<8x8xf32>
    %cst_27 = arith.constant 0.353553385 : f32
    %29 = vector.broadcast %cst_27 : f32 to vector<8x8xf32>
    %30 = arith.mulf %28, %29 : vector<8x8xf32>
    %cst_28 = arith.constant -1.000000e+09 : f32
    %31 = vector.broadcast %cst_28 : f32 to vector<8x8xf32>
    %32 = arith.select %9, %31, %30 : vector<8x8xi1>, vector<8x8xf32>
    %cst_29 = arith.constant dense<0xFF800000> : vector<8xf32>
    %33 = vector.multi_reduction <maximumf>, %32, %cst_29 [1] : vector<8x8xf32> to vector<8xf32>
    %34 = vector.shape_cast %33 : vector<8xf32> to vector<8x1xf32>
    %35 = vector.broadcast %34 : vector<8x1xf32> to vector<8x8xf32>
    %36 = arith.subf %32, %35 : vector<8x8xf32>
    %37 = math.exp %36 : vector<8x8xf32>
    %cst_30 = arith.constant dense<0.000000e+00> : vector<8xf32>
    %38 = vector.multi_reduction <add>, %37, %cst_30 [1] : vector<8x8xf32> to vector<8xf32>
    %39 = vector.shape_cast %38 : vector<8xf32> to vector<8x1xf32>
    %40 = vector.broadcast %39 : vector<8x1xf32> to vector<8x8xf32>
    %41 = arith.divf %37, %40 : vector<8x8xf32>
    %cst_31 = arith.constant dense<0.000000e+00> : vector<8x8xf32>
    %42 = tpu.matmul %41, %27, %cst_31 {dimension_numbers = #tpu.dot_dimension_numbers<[1], [0], [0], [1], [0, 0, 1, 1], [], []>} : vector<8x8xf32>, vector<8x8xf32>, vector<8x8xf32> -> vector<8x8xf32>
    %43 = vector.extract_strided_slice %14 {offsets = [0, 8], sizes = [8, 8], strides = [1, 1]} : vector<8x32xf32> to vector<8x8xf32>
    %44 = vector.extract_strided_slice %19 {offsets = [0, 8], sizes = [8, 8], strides = [1, 1]} : vector<8x32xf32> to vector<8x8xf32>
    %45 = vector.extract_strided_slice %24 {offsets = [0, 8], sizes = [8, 8], strides = [1, 1]} : vector<8x32xf32> to vector<8x8xf32>
    %cst_32 = arith.constant dense<0.000000e+00> : vector<8x8xf32>
    %46 = tpu.matmul %43, %44, %cst_32 {dimension_numbers = #tpu.dot_dimension_numbers<[1], [1], [0], [0], [0, 0, 1, 0], [], []>} : vector<8x8xf32>, vector<8x8xf32>, vector<8x8xf32> -> vector<8x8xf32>
    %cst_33 = arith.constant 0.353553385 : f32
    %47 = vector.broadcast %cst_33 : f32 to vector<8x8xf32>
    %48 = arith.mulf %46, %47 : vector<8x8xf32>
    %cst_34 = arith.constant -1.000000e+09 : f32
    %49 = vector.broadcast %cst_34 : f32 to vector<8x8xf32>
    %50 = arith.select %9, %49, %48 : vector<8x8xi1>, vector<8x8xf32>
    %cst_35 = arith.constant dense<0xFF800000> : vector<8xf32>
    %51 = vector.multi_reduction <maximumf>, %50, %cst_35 [1] : vector<8x8xf32> to vector<8xf32>
    %52 = vector.shape_cast %51 : vector<8xf32> to vector<8x1xf32>
    %53 = vector.broadcast %52 : vector<8x1xf32> to vector<8x8xf32>
    %54 = arith.subf %50, %53 : vector<8x8xf32>
    %55 = math.exp %54 : vector<8x8xf32>
    %cst_36 = arith.constant dense<0.000000e+00> : vector<8xf32>
    %56 = vector.multi_reduction <add>, %55, %cst_36 [1] : vector<8x8xf32> to vector<8xf32>
    %57 = vector.shape_cast %56 : vector<8xf32> to vector<8x1xf32>
    %58 = vector.broadcast %57 : vector<8x1xf32> to vector<8x8xf32>
    %59 = arith.divf %55, %58 : vector<8x8xf32>
    %cst_37 = arith.constant dense<0.000000e+00> : vector<8x8xf32>
    %60 = tpu.matmul %59, %45, %cst_37 {dimension_numbers = #tpu.dot_dimension_numbers<[1], [0], [0], [1], [0, 0, 1, 1], [], []>} : vector<8x8xf32>, vector<8x8xf32>, vector<8x8xf32> -> vector<8x8xf32>
    %61 = vector.extract_strided_slice %14 {offsets = [0, 16], sizes = [8, 8], strides = [1, 1]} : vector<8x32xf32> to vector<8x8xf32>
    %62 = vector.extract_strided_slice %19 {offsets = [0, 16], sizes = [8, 8], strides = [1, 1]} : vector<8x32xf32> to vector<8x8xf32>
    %63 = vector.extract_strided_slice %24 {offsets = [0, 16], sizes = [8, 8], strides = [1, 1]} : vector<8x32xf32> to vector<8x8xf32>
    %cst_38 = arith.constant dense<0.000000e+00> : vector<8x8xf32>
    %64 = tpu.matmul %61, %62, %cst_38 {dimension_numbers = #tpu.dot_dimension_numbers<[1], [1], [0], [0], [0, 0, 1, 0], [], []>} : vector<8x8xf32>, vector<8x8xf32>, vector<8x8xf32> -> vector<8x8xf32>
    %cst_39 = arith.constant 0.353553385 : f32
    %65 = vector.broadcast %cst_39 : f32 to vector<8x8xf32>
    %66 = arith.mulf %64, %65 : vector<8x8xf32>
    %cst_40 = arith.constant -1.000000e+09 : f32
    %67 = vector.broadcast %cst_40 : f32 to vector<8x8xf32>
    %68 = arith.select %9, %67, %66 : vector<8x8xi1>, vector<8x8xf32>
    %cst_41 = arith.constant dense<0xFF800000> : vector<8xf32>
    %69 = vector.multi_reduction <maximumf>, %68, %cst_41 [1] : vector<8x8xf32> to vector<8xf32>
    %70 = vector.shape_cast %69 : vector<8xf32> to vector<8x1xf32>
    %71 = vector.broadcast %70 : vector<8x1xf32> to vector<8x8xf32>
    %72 = arith.subf %68, %71 : vector<8x8xf32>
    %73 = math.exp %72 : vector<8x8xf32>
    %cst_42 = arith.constant dense<0.000000e+00> : vector<8xf32>
    %74 = vector.multi_reduction <add>, %73, %cst_42 [1] : vector<8x8xf32> to vector<8xf32>
    %75 = vector.shape_cast %74 : vector<8xf32> to vector<8x1xf32>
    %76 = vector.broadcast %75 : vector<8x1xf32> to vector<8x8xf32>
    %77 = arith.divf %73, %76 : vector<8x8xf32>
    %cst_43 = arith.constant dense<0.000000e+00> : vector<8x8xf32>
    %78 = tpu.matmul %77, %63, %cst_43 {dimension_numbers = #tpu.dot_dimension_numbers<[1], [0], [0], [1], [0, 0, 1, 1], [], []>} : vector<8x8xf32>, vector<8x8xf32>, vector<8x8xf32> -> vector<8x8xf32>
    %79 = vector.extract_strided_slice %14 {offsets = [0, 24], sizes = [8, 8], strides = [1, 1]} : vector<8x32xf32> to vector<8x8xf32>
    %80 = vector.extract_strided_slice %19 {offsets = [0, 24], sizes = [8, 8], strides = [1, 1]} : vector<8x32xf32> to vector<8x8xf32>
    %81 = vector.extract_strided_slice %24 {offsets = [0, 24], sizes = [8, 8], strides = [1, 1]} : vector<8x32xf32> to vector<8x8xf32>
    %cst_44 = arith.constant dense<0.000000e+00> : vector<8x8xf32>
    %82 = tpu.matmul %79, %80, %cst_44 {dimension_numbers = #tpu.dot_dimension_numbers<[1], [1], [0], [0], [0, 0, 1, 0], [], []>} : vector<8x8xf32>, vector<8x8xf32>, vector<8x8xf32> -> vector<8x8xf32>
    %cst_45 = arith.constant 0.353553385 : f32
    %83 = vector.broadcast %cst_45 : f32 to vector<8x8xf32>
    %84 = arith.mulf %82, %83 : vector<8x8xf32>
    %cst_46 = arith.constant -1.000000e+09 : f32
    %85 = vector.broadcast %cst_46 : f32 to vector<8x8xf32>
    %86 = arith.select %9, %85, %84 : vector<8x8xi1>, vector<8x8xf32>
    %cst_47 = arith.constant dense<0xFF800000> : vector<8xf32>
    %87 = vector.multi_reduction <maximumf>, %86, %cst_47 [1] : vector<8x8xf32> to vector<8xf32>
    %88 = vector.shape_cast %87 : vector<8xf32> to vector<8x1xf32>
    %89 = vector.broadcast %88 : vector<8x1xf32> to vector<8x8xf32>
    %90 = arith.subf %86, %89 : vector<8x8xf32>
    %91 = math.exp %90 : vector<8x8xf32>
    %cst_48 = arith.constant dense<0.000000e+00> : vector<8xf32>
    %92 = vector.multi_reduction <add>, %91, %cst_48 [1] : vector<8x8xf32> to vector<8xf32>
    %93 = vector.shape_cast %92 : vector<8xf32> to vector<8x1xf32>
    %94 = vector.broadcast %93 : vector<8x1xf32> to vector<8x8xf32>
    %95 = arith.divf %91, %94 : vector<8x8xf32>
    %cst_49 = arith.constant dense<0.000000e+00> : vector<8x8xf32>
    %96 = tpu.matmul %95, %81, %cst_49 {dimension_numbers = #tpu.dot_dimension_numbers<[1], [0], [0], [1], [0, 0, 1, 1], [], []>} : vector<8x8xf32>, vector<8x8xf32>, vector<8x8xf32> -> vector<8x8xf32>
    %97 = tpu.concatenate %42, %60, %78, %96 in 1 : vector<8x8xf32>, vector<8x8xf32>, vector<8x8xf32>, vector<8x8xf32> -> vector<8x32xf32>
    %c0_50 = arith.constant 0 : index
    %c0_51 = arith.constant 0 : index
    %98 = vector.load %arg11[%c0_50, %c0_51] : memref<32x32xf32, #tpu.memory_space<vmem>>, vector<32x32xf32>
    %cst_52 = arith.constant dense<0.000000e+00> : vector<8x32xf32>
    %99 = tpu.matmul %97, %98, %cst_52 {dimension_numbers = #tpu.dot_dimension_numbers<[1], [0], [0], [1], [0, 0, 1, 1], [], []>} : vector<8x32xf32>, vector<32x32xf32>, vector<8x32xf32> -> vector<8x32xf32>
    %c0_53 = arith.constant 0 : index
    %c0_54 = arith.constant 0 : index
    %100 = vector.load %arg12[%c0_53, %c0_54] : memref<1x32xf32, #tpu.memory_space<vmem>>, vector<1x32xf32>
    %101 = vector.broadcast %100 : vector<1x32xf32> to vector<8x32xf32>
    %102 = arith.addf %99, %101 : vector<8x32xf32>
    %c0_55 = arith.constant 0 : index
    %c0_56 = arith.constant 0 : index
    %c0_57 = arith.constant 0 : index
    %103 = vector.load %arg13[%c0_55, %c0_56, %c0_57] : memref<1x8x32xf32, #tpu.memory_space<vmem>>, vector<1x8x32xf32>
    %104 = vector.shape_cast %103 : vector<1x8x32xf32> to vector<8x32xf32>
    %105 = vector.shape_cast %102 : vector<8x32xf32> to vector<1x8x32xf32>
    tpu.vector_store %arg13[%c0_55, %c0_56, %c0_57], %105 {strides = array<i32>} : memref<1x8x32xf32, #tpu.memory_space<vmem>>, vector<1x8x32xf32>,
    return
  }
  func.func @transform_0(%arg0: i32) -> (i32, i32, i32) {
    %c0_i32 = arith.constant 0 : i32
    %c0_i32_0 = arith.constant 0 : i32
    %c0_i32_1 = arith.constant 0 : i32
    return %arg0, %c0_i32, %c0_i32_0 : i32, i32, i32
  }
  func.func @transform_1(%arg0: i32) -> (i32, i32, i32) {
    %c0_i32 = arith.constant 0 : i32
    %c0_i32_0 = arith.constant 0 : i32
    %c0_i32_1 = arith.constant 0 : i32
    return %arg0, %c0_i32, %c0_i32_0 : i32, i32, i32
  }
  func.func @transform_2(%arg0: i32) -> (i32, i32, i32) {
    %c0_i32 = arith.constant 0 : i32
    %c0_i32_0 = arith.constant 0 : i32
    %c0_i32_1 = arith.constant 0 : i32
    return %arg0, %c0_i32, %c0_i32_0 : i32, i32, i32
  }
  func.func @transform_3(%arg0: i32) -> (i32, i32, i32) {
    %c0_i32 = arith.constant 0 : i32
    %c0_i32_0 = arith.constant 0 : i32
    %c0_i32_1 = arith.constant 0 : i32
    return %arg0, %c0_i32, %c0_i32_0 : i32, i32, i32
  }
  func.func @transform_4(%arg0: i32) -> (i32, i32) {
    %c0_i32 = arith.constant 0 : i32
    %c0_i32_0 = arith.constant 0 : i32
    %c0_i32_1 = arith.constant 0 : i32
    return %c0_i32, %c0_i32_0 : i32, i32
  }
  func.func @transform_5(%arg0: i32) -> (i32, i32) {
    %c0_i32 = arith.constant 0 : i32
    %c0_i32_0 = arith.constant 0 : i32
    %c0_i32_1 = arith.constant 0 : i32
    return %c0_i32, %c0_i32_0 : i32, i32
  }
  func.func @transform_6(%arg0: i32) -> (i32, i32) {
    %c0_i32 = arith.constant 0 : i32
    %c0_i32_0 = arith.constant 0 : i32
    %c0_i32_1 = arith.constant 0 : i32
    return %c0_i32, %c0_i32_0 : i32, i32
  }
  func.func @transform_7(%arg0: i32) -> (i32, i32) {
    %c0_i32 = arith.constant 0 : i32
    %c0_i32_0 = arith.constant 0 : i32
    %c0_i32_1 = arith.constant 0 : i32
    return %c0_i32, %c0_i32_0 : i32, i32
  }
  func.func @transform_8(%arg0: i32) -> (i32, i32) {
    %c0_i32 = arith.constant 0 : i32
    %c0_i32_0 = arith.constant 0 : i32
    %c0_i32_1 = arith.constant 0 : i32
    return %c0_i32, %c0_i32_0 : i32, i32
  }
  func.func @transform_9(%arg0: i32) -> (i32, i32) {
    %c0_i32 = arith.constant 0 : i32
    %c0_i32_0 = arith.constant 0 : i32
    %c0_i32_1 = arith.constant 0 : i32
    return %c0_i32, %c0_i32_0 : i32, i32
  }
  func.func @transform_10(%arg0: i32) -> (i32, i32) {
    %c0_i32 = arith.constant 0 : i32
    %c0_i32_0 = arith.constant 0 : i32
    %c0_i32_1 = arith.constant 0 : i32
    return %c0_i32, %c0_i32_0 : i32, i32
  }
  func.func @transform_11(%arg0: i32) -> (i32, i32) {
    %c0_i32 = arith.constant 0 : i32
    %c0_i32_0 = arith.constant 0 : i32
    %c0_i32_1 = arith.constant 0 : i32
    return %c0_i32, %c0_i32_0 : i32, i32
  }
  func.func @transform_12(%arg0: i32) -> (i32, i32, i32) {
    %c0_i32 = arith.constant 0 : i32
    %c0_i32_0 = arith.constant 0 : i32
    %c0_i32_1 = arith.constant 0 : i32
    return %arg0, %c0_i32, %c0_i32_0 : i32, i32, i32
  }
}

</mosaic_0001>

<llo_original>
// kernel: tpu_custom_call.1
$region0: #{tpu_custom_call.1}
  #allocation0 [shape = 'u32[]', space=smem, size = 0x4, offset = 0x4, fixed_abs, tag = 'smem constant byte address 0x4 - core index']
  #allocation1 [shape = 'u32[72,128]{1,0:T(1,128)}', space=vmem, size = 0x9000, scoped, tag = 'internal scratch']
  %s0 = inlined_call_operand.hbm [shape: f32[2,8,32], index: 0, kind: input, shape index: {}]
  %s1 = inlined_call_operand.hbm [shape: f32[2,8,32], index: 1, kind: input, shape index: {}]
  %s2 = inlined_call_operand.hbm [shape: f32[2,8,32], index: 2, kind: input, shape index: {}]
  %s3 = inlined_call_operand.hbm [shape: f32[2,8,8], index: 3, kind: input, shape index: {}]
  %s4 = inlined_call_operand.hbm [shape: f32[32,32], index: 4, kind: input, shape index: {}]
  %s5 = inlined_call_operand.vmem [shape: f32[1,32], index: 5, kind: input, shape index: {}]
  %s6 = inlined_call_operand.hbm [shape: f32[32,32], index: 6, kind: input, shape index: {}]
  %s7 = inlined_call_operand.vmem [shape: f32[1,32], index: 7, kind: input, shape index: {}]
  %s8 = inlined_call_operand.hbm [shape: f32[32,32], index: 8, kind: input, shape index: {}]
  %s9 = inlined_call_operand.vmem [shape: f32[1,32], index: 9, kind: input, shape index: {}]
  %s10 = inlined_call_operand.hbm [shape: f32[32,32], index: 10, kind: input, shape index: {}]
  %s11 = inlined_call_operand.vmem [shape: f32[1,32], index: 11, kind: input, shape index: {}]
  %s12 = inlined_call_operand.hbm [shape: f32[2,8,32], index: 12, kind: output, shape index: {}]
  %s13 = sld [smem:[#allocation0]]
  $region113: #{tpu_custom_call.1} parent=0
    _
  %s15 = ssub.s32 1, %s13
  %s16 = scalar_select 0, %s15, %s13
  $region1: #{tpu_custom_call.1} parent=0
    #allocation2 [shape = 'u8[8192]{0}', space=vmem, size = 0x2000, scoped, tag = 'input window, operand 0']
    #allocation3 [shape = 's32[2]{0}', space=sflag, size = 0x8, scoped, tag = 'scoped memory for tpu_custom_call.1']
    #allocation4 [shape = 's32[2]{0}', space=sflag, size = 0x8, scoped, tag = 'scoped memory for tpu_custom_call.1']
    #allocation5 [shape = 'u8[8192]{0}', space=vmem, size = 0x2000, scoped, tag = 'input window, operand 1']
    #allocation6 [shape = 's32[2]{0}', space=sflag, size = 0x8, scoped, tag = 'scoped memory for tpu_custom_call.1']
    #allocation7 [shape = 'u8[8192]{0}', space=vmem, size = 0x2000, scoped, tag = 'input window, operand 2']
    #allocation8 [shape = 'u8[8192]{0}', space=vmem, size = 0x2000, scoped, tag = 'input window, operand 3']
    #allocation9 [shape = 's32[2]{0}', space=sflag, size = 0x8, scoped, tag = 'scoped memory for tpu_custom_call.1']
    #allocation10 [shape = 'u8[16384]{0}', space=vmem, size = 0x4000, scoped, tag = 'input window, operand 4, single buffered']
    #allocation11 [shape = 'u8[16384]{0}', space=vmem, size = 0x4000, scoped, tag = 'input window, operand 6, single buffered']
    #allocation12 [shape = 's32[1]{0}', space=sflag, size = 0x4, scoped, tag = 'scoped memory for tpu_custom_call.1']
    #allocation13 [shape = 'u8[16384]{0}', space=vmem, size = 0x4000, scoped, tag = 'input window, operand 8, single buffered']
    #allocation14 [shape = 'u8[16384]{0}', space=vmem, size = 0x4000, scoped, tag = 'input window, operand 10, single buffered']
    #allocation15 [shape = 's32[1]{0}', space=sflag, size = 0x4, scoped, tag = 'scoped memory for tpu_custom_call.1']
    #allocation16 [shape = 'u8[8192]{0}', space=vmem, size = 0x2000, scoped, tag = 'output window, operand 0']
    %17 = vsyncpa [#allocation3], 0
    %s18 = scalar_lea.sflag [#allocation3], 1
    %19 = vsyncpa %s18, 0
    %20 = vsyncpa [#allocation6], 0
    %s21 = scalar_lea.sflag [#allocation6], 1
    %22 = vsyncpa %s21, 0
    %23 = vsyncpa [#allocation9], 0
    %s24 = scalar_lea.sflag [#allocation9], 1
    %25 = vsyncpa %s24, 0
    %26 = vsyncpa [#allocation12], 0
    %27 = vsyncpa [#allocation15], 0
    %28 = vsyncpa [#allocation4], 0
    %s29 = scalar_lea.sflag [#allocation4], 1
    %30 = vsyncpa %s29, 0
    loop: start=0, step=1, limit=4
    $region2: #{tpu_custom_call.1} parent=1 // loop_pre_header
      _
    $region3: #{tpu_custom_call.1} parent=1 // loop_header
      %s32 = sphi 0, %s36
      %p33 = scmp.ge.s32.totalorder %s32, 4
      %s42 = sphi 0, %s44
      %s45 = sphi 0, %s42
      %s46 = sphi 0, %s45
      %s62 = sphi 0, %s46
      %s68 = sphi 0, %s70
      %s71 = sphi 0, %s68
      %s72 = sphi 0, %s71
      %s88 = sphi 0, %s72
      %s94 = sphi 0, %s96
      %s97 = sphi 0, %s94
      %s98 = sphi 0, %s97
      %s114 = sphi 0, %s98
      %s120 = sphi 0, %s122
      %s123 = sphi 0, %s120
      %s124 = sphi 0, %s123
      %s140 = sphi 0, %s124
      %s144 = sphi 0, %s144
      %s146 = sphi 0, %s144
      %s147 = sphi 0, %s146
      %s161 = sphi 0, %s147
      %s165 = sphi 0, %s165
      %s167 = sphi 0, %s165
      %s168 = sphi 0, %s167
      %s182 = sphi 0, %s168
      %s186 = sphi 0, %s186
      %s188 = sphi 0, %s186
      %s189 = sphi 0, %s188
      %s203 = sphi 0, %s189
      %s207 = sphi 0, %s207
      %s209 = sphi 0, %s207
      %s210 = sphi 0, %s209
      %s224 = sphi 0, %s210
      %s228 = sphi 0, %s228
      %s230 = sphi 0, %s228
      %s231 = sphi 0, %s230
      %s245 = sphi 0, %s231
      %s249 = sphi 0, %s249
      %s251 = sphi 0, %s249
      %s252 = sphi 0, %s251
      %s266 = sphi 0, %s252
      %s270 = sphi 0, %s270
      %s272 = sphi 0, %s270
      %s273 = sphi 0, %s272
      %s287 = sphi 0, %s273
      %s291 = sphi 0, %s291
      %s293 = sphi 0, %s291
      %s294 = sphi 0, %s293
      %s308 = sphi 0, %s294
      %s314 = sphi 0, %s316
      %s317 = sphi 0, %s314
      %s318 = sphi 0, %s317
      %s334 = sphi 0, %s318
    $region4: #{tpu_custom_call.1} parent=1 // loop_header_branch
      %35 = sbr.rel (%p33) target = $region8
    $region5: #{tpu_custom_call.1} parent=1 // loop_body
      %s37 = ssub.s32 %s32, 1
      %s38 = ssub.s32 %s32, 2
      %s39 = sadd.s32 %s32, 1
      %s40 = ssub.s32 %s32, %s39
      %p41 = scmp.eq.s32.totalorder %s40, 0
      %s43 = sadd.s32 %s42, 1
      %s44 = scalar_select %p41, %s42, %s43
      %p47 = pneg %p41
      %p48 = scmp.eq.s32.totalorder %s32, 1
      %p49 = por %p47, %p48
      %p50 = scmp.ne.s32.totalorder %s42, %s45
      %p51 = scmp.eq.s32.totalorder %s32, 0
      %p52 = por %p50, %p51
      %p53 = scmp.ne.s32.totalorder %s42, %s45
      %p54 = scmp.eq.s32.totalorder %s37, 1
      %p55 = por %p53, %p54
      %p56 = scmp.ne.s32.totalorder %s45, %s46
      %p57 = scmp.eq.s32.totalorder %s37, 0
      %p58 = por %p56, %p57
      %p59 = scmp.ne.s32.totalorder %s45, %s46
      %p60 = scmp.eq.s32.totalorder %s38, 1
      %p61 = por %p59, %p60
      %p63 = scmp.ne.s32.totalorder %s46, %s62
      %p64 = scmp.eq.s32.totalorder %s38, 0
      %p65 = por %p63, %p64
      %s66 = ssub.s32 %s32, %s39
      %p67 = scmp.eq.s32.totalorder %s66, 0
      %s69 = sadd.s32 %s68, 1
      %s70 = scalar_select %p67, %s68, %s69
      %p73 = pneg %p67
      %p74 = scmp.eq.s32.totalorder %s32, 1
      %p75 = por %p73, %p74
      %p76 = scmp.ne.s32.totalorder %s68, %s71
      %p77 = scmp.eq.s32.totalorder %s32, 0
      %p78 = por %p76, %p77
      %p79 = scmp.ne.s32.totalorder %s68, %s71
      %p80 = scmp.eq.s32.totalorder %s37, 1
      %p81 = por %p79, %p80
      %p82 = scmp.ne.s32.totalorder %s71, %s72
      %p83 = scmp.eq.s32.totalorder %s37, 0
      %p84 = por %p82, %p83
      %p85 = scmp.ne.s32.totalorder %s71, %s72
      %p86 = scmp.eq.s32.totalorder %s38, 1
      %p87 = por %p85, %p86
      %p89 = scmp.ne.s32.totalorder %s72, %s88
      %p90 = scmp.eq.s32.totalorder %s38, 0
      %p91 = por %p89, %p90
      %s92 = ssub.s32 %s32, %s39
      %p93 = scmp.eq.s32.totalorder %s92, 0
      %s95 = sadd.s32 %s94, 1
      %s96 = scalar_select %p93, %s94, %s95
      %p99 = pneg %p93
      %p100 = scmp.eq.s32.totalorder %s32, 1
      %p101 = por %p99, %p100
      %p102 = scmp.ne.s32.totalorder %s94, %s97
      %p103 = scmp.eq.s32.totalorder %s32, 0
      %p104 = por %p102, %p103
      %p105 = scmp.ne.s32.totalorder %s94, %s97
      %p106 = scmp.eq.s32.totalorder %s37, 1
      %p107 = por %p105, %p106
      %p108 = scmp.ne.s32.totalorder %s97, %s98
      %p109 = scmp.eq.s32.totalorder %s37, 0
      %p110 = por %p108, %p109
      %p111 = scmp.ne.s32.totalorder %s97, %s98
      %p112 = scmp.eq.s32.totalorder %s38, 1
      %p113 = por %p111, %p112
      %p115 = scmp.ne.s32.totalorder %s98, %s114
      %p116 = scmp.eq.s32.totalorder %s38, 0
      %p117 = por %p115, %p116
      %s118 = ssub.s32 %s32, %s39
      %p119 = scmp.eq.s32.totalorder %s118, 0
      %s121 = sadd.s32 %s120, 1
      %s122 = scalar_select %p119, %s120, %s121
      %p125 = pneg %p119
      %p126 = scmp.eq.s32.totalorder %s32, 1
      %p127 = por %p125, %p126
      %p128 = scmp.ne.s32.totalorder %s120, %s123
      %p129 = scmp.eq.s32.totalorder %s32, 0
      %p130 = por %p128, %p129
      %p131 = scmp.ne.s32.totalorder %s120, %s123
      %p132 = scmp.eq.s32.totalorder %s37, 1
      %p133 = por %p131, %p132
      %p134 = scmp.ne.s32.totalorder %s123, %s124
      %p135 = scmp.eq.s32.totalorder %s37, 0
      %p136 = por %p134, %p135
      %p137 = scmp.ne.s32.totalorder %s123, %s124
      %p138 = scmp.eq.s32.totalorder %s38, 1
      %p139 = por %p137, %p138
      %p141 = scmp.ne.s32.totalorder %s124, %s140
      %p142 = scmp.eq.s32.totalorder %s38, 0
      %p143 = por %p141, %p142
      %s145 = sadd.s32 %s144, 1
      %p148 = scmp.eq.s32.totalorder %s32, 1
      %p149 = scmp.ne.s32.totalorder %s144, %s146
      %p150 = scmp.eq.s32.totalorder %s32, 0
      %p151 = por %p149, %p150
      %p152 = scmp.ne.s32.totalorder %s144, %s146
      %p153 = scmp.eq.s32.totalorder %s37, 1
      %p154 = por %p152, %p153
      %p155 = scmp.ne.s32.totalorder %s146, %s147
      %p156 = scmp.eq.s32.totalorder %s37, 0
      %p157 = por %p155, %p156
      %p158 = scmp.ne.s32.totalorder %s146, %s147
      %p159 = scmp.eq.s32.totalorder %s38, 1
      %p160 = por %p158, %p159
      %p162 = scmp.ne.s32.totalorder %s147, %s161
      %p163 = scmp.eq.s32.totalorder %s38, 0
      %p164 = por %p162, %p163
      %s166 = sadd.s32 %s165, 1
      %p169 = scmp.eq.s32.totalorder %s32, 1
      %p170 = scmp.ne.s32.totalorder %s165, %s167
      %p171 = scmp.eq.s32.totalorder %s32, 0
      %p172 = por %p170, %p171
      %p173 = scmp.ne.s32.totalorder %s165, %s167
      %p174 = scmp.eq.s32.totalorder %s37, 1
      %p175 = por %p173, %p174
      %p176 = scmp.ne.s32.totalorder %s167, %s168
      %p177 = scmp.eq.s32.totalorder %s37, 0
      %p178 = por %p176, %p177
      %p179 = scmp.ne.s32.totalorder %s167, %s168
      %p180 = scmp.eq.s32.totalorder %s38, 1
      %p181 = por %p179, %p180
      %p183 = scmp.ne.s32.totalorder %s168, %s182
      %p184 = scmp.eq.s32.totalorder %s38, 0
      %p185 = por %p183, %p184
      %s187 = sadd.s32 %s186, 1
      %p190 = scmp.eq.s32.totalorder %s32, 1
      %p191 = scmp.ne.s32.totalorder %s186, %s188
      %p192 = scmp.eq.s32.totalorder %s32, 0
      %p193 = por %p191, %p192
      %p194 = scmp.ne.s32.totalorder %s186, %s188
      %p195 = scmp.eq.s32.totalorder %s37, 1
      %p196 = por %p194, %p195
      %p197 = scmp.ne.s32.totalorder %s188, %s189
      %p198 = scmp.eq.s32.totalorder %s37, 0
      %p199 = por %p197, %p198
      %p200 = scmp.ne.s32.totalorder %s188, %s189
      %p201 = scmp.eq.s32.totalorder %s38, 1
      %p202 = por %p200, %p201
      %p204 = scmp.ne.s32.totalorder %s189, %s203
      %p205 = scmp.eq.s32.totalorder %s38, 0
      %p206 = por %p204, %p205
      %s208 = sadd.s32 %s207, 1
      %p211 = scmp.eq.s32.totalorder %s32, 1
      %p212 = scmp.ne.s32.totalorder %s207, %s209
      %p213 = scmp.eq.s32.totalorder %s32, 0
      %p214 = por %p212, %p213
      %p215 = scmp.ne.s32.totalorder %s207, %s209
      %p216 = scmp.eq.s32.totalorder %s37, 1
      %p217 = por %p215, %p216
      %p218 = scmp.ne.s32.totalorder %s209, %s210
      %p219 = scmp.eq.s32.totalorder %s37, 0
      %p220 = por %p218, %p219
      %p221 = scmp.ne.s32.totalorder %s209, %s210
      %p222 = scmp.eq.s32.totalorder %s38, 1
      %p223 = por %p221, %p222
      %p225 = scmp.ne.s32.totalorder %s210, %s224
      %p226 = scmp.eq.s32.totalorder %s38, 0
      %p227 = por %p225, %p226
      %s229 = sadd.s32 %s228, 1
      %p232 = scmp.eq.s32.totalorder %s32, 1
      %p233 = scmp.ne.s32.totalorder %s228, %s230
      %p234 = scmp.eq.s32.totalorder %s32, 0
      %p235 = por %p233, %p234
      %p236 = scmp.ne.s32.totalorder %s228, %s230
      %p237 = scmp.eq.s32.totalorder %s37, 1
      %p238 = por %p236, %p237
      %p239 = scmp.ne.s32.totalorder %s230, %s231
      %p240 = scmp.eq.s32.totalorder %s37, 0
      %p241 = por %p239, %p240
      %p242 = scmp.ne.s32.totalorder %s230, %s231
      %p243 = scmp.eq.s32.totalorder %s38, 1
      %p244 = por %p242, %p243
      %p246 = scmp.ne.s32.totalorder %s231, %s245
      %p247 = scmp.eq.s32.totalorder %s38, 0
      %p248 = por %p246, %p247
      %s250 = sadd.s32 %s249, 1
      %p253 = scmp.eq.s32.totalorder %s32, 1
      %p254 = scmp.ne.s32.totalorder %s249, %s251
      %p255 = scmp.eq.s32.totalorder %s32, 0
      %p256 = por %p254, %p255
      %p257 = scmp.ne.s32.totalorder %s249, %s251
      %p258 = scmp.eq.s32.totalorder %s37, 1
      %p259 = por %p257, %p258
      %p260 = scmp.ne.s32.totalorder %s251, %s252
      %p261 = scmp.eq.s32.totalorder %s37, 0
      %p262 = por %p260, %p261
      %p263 = scmp.ne.s32.totalorder %s251, %s252
      %p264 = scmp.eq.s32.totalorder %s38, 1
      %p265 = por %p263, %p264
      %p267 = scmp.ne.s32.totalorder %s252, %s266
      %p268 = scmp.eq.s32.totalorder %s38, 0
      %p269 = por %p267, %p268
      %s271 = sadd.s32 %s270, 1
      %p274 = scmp.eq.s32.totalorder %s32, 1
      %p275 = scmp.ne.s32.totalorder %s270, %s272
      %p276 = scmp.eq.s32.totalorder %s32, 0
      %p277 = por %p275, %p276
      %p278 = scmp.ne.s32.totalorder %s270, %s272
      %p279 = scmp.eq.s32.totalorder %s37, 1
      %p280 = por %p278, %p279
      %p281 = scmp.ne.s32.totalorder %s272, %s273
      %p282 = scmp.eq.s32.totalorder %s37, 0
      %p283 = por %p281, %p282
      %p284 = scmp.ne.s32.totalorder %s272, %s273
      %p285 = scmp.eq.s32.totalorder %s38, 1
      %p286 = por %p284, %p285
      %p288 = scmp.ne.s32.totalorder %s273, %s287
      %p289 = scmp.eq.s32.totalorder %s38, 0
      %p290 = por %p288, %p289
      %s292 = sadd.s32 %s291, 1
      %p295 = scmp.eq.s32.totalorder %s32, 1
      %p296 = scmp.ne.s32.totalorder %s291, %s293
      %p297 = scmp.eq.s32.totalorder %s32, 0
      %p298 = por %p296, %p297
      %p299 = scmp.ne.s32.totalorder %s291, %s293
      %p300 = scmp.eq.s32.totalorder %s37, 1
      %p301 = por %p299, %p300
      %p302 = scmp.ne.s32.totalorder %s293, %s294
      %p303 = scmp.eq.s32.totalorder %s37, 0
      %p304 = por %p302, %p303
      %p305 = scmp.ne.s32.totalorder %s293, %s294
      %p306 = scmp.eq.s32.totalorder %s38, 1
      %p307 = por %p305, %p306
      %p309 = scmp.ne.s32.totalorder %s294, %s308
      %p310 = scmp.eq.s32.totalorder %s38, 0
      %p311 = por %p309, %p310
      %s312 = ssub.s32 %s32, %s39
      %p313 = scmp.eq.s32.totalorder %s312, 0
      %s315 = sadd.s32 %s314, 1
      %s316 = scalar_select %p313, %s314, %s315
      %p319 = pneg %p313
      %p320 = scmp.eq.s32.totalorder %s32, 1
      %p321 = por %p319, %p320
      %p322 = scmp.ne.s32.totalorder %s314, %s317
      %p323 = scmp.eq.s32.totalorder %s32, 0
      %p324 = por %p322, %p323
      %p325 = scmp.ne.s32.totalorder %s314, %s317
      %p326 = scmp.eq.s32.totalorder %s37, 1
      %p327 = por %p325, %p326
      %p328 = scmp.ne.s32.totalorder %s317, %s318
      %p329 = scmp.eq.s32.totalorder %s37, 0
      %p330 = por %p328, %p329
      %p331 = scmp.ne.s32.totalorder %s317, %s318
      %p332 = scmp.eq.s32.totalorder %s38, 1
      %p333 = por %p331, %p332
      %p335 = scmp.ne.s32.totalorder %s318, %s334
      %p336 = scmp.eq.s32.totalorder %s38, 0
      %p337 = por %p335, %p336
      %p338 = scmp.le.s32.totalorder 1, %s32
      %p339 = scmp.lt.s32.totalorder %s32, 3
      %p340 = pnand %p338, %p339
      %p341 = pneg %p340
      // Predicated region
      $region9: #{tpu_custom_call.1} parent=5 // pred_check
        _
      $region10: #{tpu_custom_call.1} parent=5 // pred_check_branch
        %343 = sbr.rel (%p340) target = $region12
      $region11: #{tpu_custom_call.1} parent=5 // pred_region
        %s344 = ssub.s32 %s32, 1
        // Predicated region
        $region13: #{tpu_custom_call.1} parent=11 // pred_check
          %p345 = pneg %p157
        $region14: #{tpu_custom_call.1} parent=11 // pred_check_branch
          %347 = sbr.rel (%p345) target = $region16
        $region15: #{tpu_custom_call.1} parent=11 // pred_region
          %349 = vsyncadd [#allocation9], 0
          %s350 = sshll.u32 %s4, 4
          %s351 = int_to_ptr.hbm [resolvable:$true] %s350
          %s352 = sshll.u32 [#allocation10], 4
          %s353 = int_to_ptr.vmem [resolvable:$true] %s352
          %358 = dma.hbm_to_vmem [thread:$0]  %s351, 512, %s353, [#allocation9], 128, 128, 8
        $region16: #{tpu_custom_call.1} parent=11 // pred_fallthru
          _
        // Predicated region
        $region17: #{tpu_custom_call.1} parent=11 // pred_check
          %p359 = pneg %p178
        $region18: #{tpu_custom_call.1} parent=11 // pred_check_branch
          %361 = sbr.rel (%p359) target = $region20
        $region19: #{tpu_custom_call.1} parent=11 // pred_region
          _
        $region20: #{tpu_custom_call.1} parent=11 // pred_fallthru
          _
        // Predicated region
        $region21: #{tpu_custom_call.1} parent=11 // pred_check
          %p362 = pneg %p199
        $region22: #{tpu_custom_call.1} parent=11 // pred_check_branch
          %364 = sbr.rel (%p362) target = $region24
        $region23: #{tpu_custom_call.1} parent=11 // pred_region
          %366 = vsyncadd [#allocation12], 0
          %s367 = sshll.u32 %s6, 4
          %s368 = int_to_ptr.hbm [resolvable:$true] %s367
          %s369 = sshll.u32 [#allocation11], 4
          %s370 = int_to_ptr.vmem [resolvable:$true] %s369
          %375 = dma.hbm_to_vmem [thread:$0]  %s368, 512, %s370, [#allocation12], 128, 128, 8
        $region24: #{tpu_custom_call.1} parent=11 // pred_fallthru
          _
        // Predicated region
        $region25: #{tpu_custom_call.1} parent=11 // pred_check
          %p376 = pneg %p220
        $region26: #{tpu_custom_call.1} parent=11 // pred_check_branch
          %378 = sbr.rel (%p376) target = $region28
        $region27: #{tpu_custom_call.1} parent=11 // pred_region
          _
        $region28: #{tpu_custom_call.1} parent=11 // pred_fallthru
          _
        // Predicated region
        $region29: #{tpu_custom_call.1} parent=11 // pred_check
          %p379 = pneg %p241
        $region30: #{tpu_custom_call.1} parent=11 // pred_check_branch
          %381 = sbr.rel (%p379) target = $region32
        $region31: #{tpu_custom_call.1} parent=11 // pred_region
          %383 = vsyncadd [#allocation12], 0
          %s384 = sshll.u32 %s8, 4
          %s385 = int_to_ptr.hbm [resolvable:$true] %s384
          %s386 = sshll.u32 [#allocation13], 4
          %s387 = int_to_ptr.vmem [resolvable:$true] %s386
          %392 = dma.hbm_to_vmem [thread:$0]  %s385, 512, %s387, [#allocation12], 128, 128, 8
        $region32: #{tpu_custom_call.1} parent=11 // pred_fallthru
          _
        // Predicated region
        $region33: #{tpu_custom_call.1} parent=11 // pred_check
          %p393 = pneg %p262
        $region34: #{tpu_custom_call.1} parent=11 // pred_check_branch
          %395 = sbr.rel (%p393) target = $region36
        $region35: #{tpu_custom_call.1} parent=11 // pred_region
          _
        $region36: #{tpu_custom_call.1} parent=11 // pred_fallthru
          _
        // Predicated region
        $region37: #{tpu_custom_call.1} parent=11 // pred_check
          %p396 = pneg %p283
        $region38: #{tpu_custom_call.1} parent=11 // pred_check_branch
          %398 = sbr.rel (%p396) target = $region40
        $region39: #{tpu_custom_call.1} parent=11 // pred_region
          %400 = vsyncadd [#allocation15], 0
          %s401 = sshll.u32 %s10, 4
          %s402 = int_to_ptr.hbm [resolvable:$true] %s401
          %s403 = sshll.u32 [#allocation14], 4
          %s404 = int_to_ptr.vmem [resolvable:$true] %s403
          %409 = dma.hbm_to_vmem [thread:$0]  %s402, 512, %s404, [#allocation15], 128, 128, 8
        $region40: #{tpu_custom_call.1} parent=11 // pred_fallthru
          _
        // Predicated region
        $region41: #{tpu_custom_call.1} parent=11 // pred_check
          %p410 = pneg %p304
        $region42: #{tpu_custom_call.1} parent=11 // pred_check_branch
          %412 = sbr.rel (%p410) target = $region44
        $region43: #{tpu_custom_call.1} parent=11 // pred_region
          _
        $region44: #{tpu_custom_call.1} parent=11 // pred_fallthru
          _
      $region12: #{tpu_custom_call.1} parent=5 // pred_fallthru
        _
      %p413 = scmp.lt.s32.totalorder %s32, 2
      // Predicated region
      $region45: #{tpu_custom_call.1} parent=5 // pred_check
        %p414 = pneg %p413
      $region46: #{tpu_custom_call.1} parent=5 // pred_check_branch
        %416 = sbr.rel (%p414) target = $region48
      $region47: #{tpu_custom_call.1} parent=5 // pred_region
        // Predicated region
        $region49: #{tpu_custom_call.1} parent=47 // pred_check
          %p417 = pneg %p52
        $region50: #{tpu_custom_call.1} parent=47 // pred_check_branch
          %419 = sbr.rel (%p417) target = $region52
        $region51: #{tpu_custom_call.1} parent=47 // pred_region
          %s420 = sand.u32 %s42, 1
          %s421 = scalar_lea.sflag [#allocation3], %s420
          %s422 = sand.u32 %s42, 1
          %s423 = smul.addr %s422, 8
          %s424 = scalar_lea.vmem [#allocation2], %s423
          %426 = vsyncadd %s421, 0
          %s427 = smul.addr %s32, 8
          %s428 = scalar_lea.hbm %s0, %s427
          %s430 = sshll.u32 %s428, 4
          %s431 = int_to_ptr.hbm [resolvable:$true] %s430
          %s432 = sshll.u32 %s424, 4
          %s433 = int_to_ptr.vmem [resolvable:$true] %s432
          %435 = dma.hbm_to_vmem [thread:$0]  %s431, 128, %s433, %s421
        $region52: #{tpu_custom_call.1} parent=47 // pred_fallthru
          _
        // Predicated region
        $region53: #{tpu_custom_call.1} parent=47 // pred_check
          %p436 = pneg %p78
        $region54: #{tpu_custom_call.1} parent=47 // pred_check_branch
          %438 = sbr.rel (%p436) target = $region56
        $region55: #{tpu_custom_call.1} parent=47 // pred_region
          %s439 = sand.u32 %s32, 1
          %s440 = scalar_lea.sflag [#allocation6], %s439
          %s441 = sand.u32 %s68, 1
          %s442 = smul.addr %s441, 8
          %s443 = scalar_lea.vmem [#allocation5], %s442
          %445 = vsyncadd %s440, 0
          %s446 = smul.addr %s32, 8
          %s447 = scalar_lea.hbm %s1, %s446
          %s449 = sshll.u32 %s447, 4
          %s450 = int_to_ptr.hbm [resolvable:$true] %s449
          %s451 = sshll.u32 %s443, 4
          %s452 = int_to_ptr.vmem [resolvable:$true] %s451
          %454 = dma.hbm_to_vmem [thread:$0]  %s450, 128, %s452, %s440
        $region56: #{tpu_custom_call.1} parent=47 // pred_fallthru
          _
        // Predicated region
        $region57: #{tpu_custom_call.1} parent=47 // pred_check
          %p455 = pneg %p104
        $region58: #{tpu_custom_call.1} parent=47 // pred_check_branch
          %457 = sbr.rel (%p455) target = $region60
        $region59: #{tpu_custom_call.1} parent=47 // pred_region
          %s458 = sand.u32 %s32, 1
          %s459 = scalar_lea.sflag [#allocation6], %s458
          %s460 = sand.u32 %s94, 1
          %s461 = smul.addr %s460, 8
          %s462 = scalar_lea.vmem [#allocation7], %s461
          %464 = vsyncadd %s459, 0
          %s465 = smul.addr %s32, 8
          %s466 = scalar_lea.hbm %s2, %s465
          %s468 = sshll.u32 %s466, 4
          %s469 = int_to_ptr.hbm [resolvable:$true] %s468
          %s470 = sshll.u32 %s462, 4
          %s471 = int_to_ptr.vmem [resolvable:$true] %s470
          %473 = dma.hbm_to_vmem [thread:$0]  %s469, 128, %s471, %s459
        $region60: #{tpu_custom_call.1} parent=47 // pred_fallthru
          _
        // Predicated region
        $region61: #{tpu_custom_call.1} parent=47 // pred_check
          %p474 = pneg %p130
        $region62: #{tpu_custom_call.1} parent=47 // pred_check_branch
          %476 = sbr.rel (%p474) target = $region64
        $region63: #{tpu_custom_call.1} parent=47 // pred_region
          %s477 = sand.u32 %s32, 1
          %s478 = scalar_lea.sflag [#allocation9], %s477
          %s479 = sand.u32 %s120, 1
          %s480 = smul.addr %s479, 8
          %s481 = scalar_lea.vmem [#allocation8], %s480
          %483 = vsyncadd %s478, 0
          %s484 = smul.addr %s32, 8
          %s485 = scalar_lea.hbm %s3, %s484
          %s487 = sshll.u32 %s485, 4
          %s488 = int_to_ptr.hbm [resolvable:$true] %s487
          %s489 = sshll.u32 %s481, 4
          %s490 = int_to_ptr.vmem [resolvable:$true] %s489
          %492 = dma.hbm_to_vmem [thread:$0]  %s488, 128, %s490, %s478
        $region64: #{tpu_custom_call.1} parent=47 // pred_fallthru
          _
      $region48: #{tpu_custom_call.1} parent=5 // pred_fallthru
        _
      %p493 = scmp.le.s32.totalorder 1, %s32
      %p494 = scmp.lt.s32.totalorder %s32, 3
      %p495 = pnand %p493, %p494
      %p496 = pneg %p495
      // Predicated region
      $region65: #{tpu_custom_call.1} parent=5 // pred_check
        _
      $region66: #{tpu_custom_call.1} parent=5 // pred_check_branch
        %498 = sbr.rel (%p495) target = $region68
      $region67: #{tpu_custom_call.1} parent=5 // pred_region
        %s499 = ssub.s32 %s32, 1
        %s500 = sand.u32 %s45, 1
        %s501 = scalar_lea.sflag [#allocation3], %s500
        %s502 = sand.u32 %s45, 1
        %s503 = smul.addr %s502, 8
        %s504 = scalar_lea.vmem [#allocation2], %s503
        // Predicated region
        $region69: #{tpu_custom_call.1} parent=67 // pred_check
          %p505 = pneg %p58
        $region70: #{tpu_custom_call.1} parent=67 // pred_check_branch
          %507 = sbr.rel (%p505) target = $region72
        $region71: #{tpu_custom_call.1} parent=67 // pred_region
          %509 = dma.done %s501, 128
        $region72: #{tpu_custom_call.1} parent=67 // pred_fallthru
          _
        %s510 = sand.u32 %s37, 1
        %s511 = scalar_lea.sflag [#allocation6], %s510
        %s512 = sand.u32 %s71, 1
        %s513 = smul.addr %s512, 8
        %s514 = scalar_lea.vmem [#allocation5], %s513
        // Predicated region
        $region73: #{tpu_custom_call.1} parent=67 // pred_check
          %p515 = pneg %p84
        $region74: #{tpu_custom_call.1} parent=67 // pred_check_branch
          %517 = sbr.rel (%p515) target = $region76
        $region75: #{tpu_custom_call.1} parent=67 // pred_region
          %519 = dma.done %s511, 128
        $region76: #{tpu_custom_call.1} parent=67 // pred_fallthru
          _
        %s520 = sand.u32 %s37, 1
        %s521 = scalar_lea.sflag [#allocation6], %s520
        %s522 = sand.u32 %s97, 1
        %s523 = smul.addr %s522, 8
        %s524 = scalar_lea.vmem [#allocation7], %s523
        // Predicated region
        $region77: #{tpu_custom_call.1} parent=67 // pred_check
          %p525 = pneg %p110
        $region78: #{tpu_custom_call.1} parent=67 // pred_check_branch
          %527 = sbr.rel (%p525) target = $region80
        $region79: #{tpu_custom_call.1} parent=67 // pred_region
          %529 = dma.done %s521, 128
        $region80: #{tpu_custom_call.1} parent=67 // pred_fallthru
          _
        %s530 = sand.u32 %s37, 1
        %s531 = scalar_lea.sflag [#allocation9], %s530
        %s532 = sand.u32 %s123, 1
        %s533 = smul.addr %s532, 8
        %s534 = scalar_lea.vmem [#allocation8], %s533
        // Predicated region
        $region81: #{tpu_custom_call.1} parent=67 // pred_check
          %p535 = pneg %p136
        $region82: #{tpu_custom_call.1} parent=67 // pred_check_branch
          %537 = sbr.rel (%p535) target = $region84
        $region83: #{tpu_custom_call.1} parent=67 // pred_region
          %539 = dma.done %s531, 128
        $region84: #{tpu_custom_call.1} parent=67 // pred_fallthru
          _
        // Predicated region
        $region85: #{tpu_custom_call.1} parent=67 // pred_check
          %p540 = pneg %p157
        $region86: #{tpu_custom_call.1} parent=67 // pred_check_branch
          %542 = sbr.rel (%p540) target = $region88
        $region87: #{tpu_custom_call.1} parent=67 // pred_region
          %544 = dma.done [#allocation9], 512
        $region88: #{tpu_custom_call.1} parent=67 // pred_fallthru
          _
        // Predicated region
        $region89: #{tpu_custom_call.1} parent=67 // pred_check
          %p545 = pneg %p199
        $region90: #{tpu_custom_call.1} parent=67 // pred_check_branch
          %547 = sbr.rel (%p545) target = $region92
        $region91: #{tpu_custom_call.1} parent=67 // pred_region
          %549 = dma.done [#allocation12], 512
        $region92: #{tpu_custom_call.1} parent=67 // pred_fallthru
          _
        // Predicated region
        $region93: #{tpu_custom_call.1} parent=67 // pred_check
          %p550 = pneg %p241
        $region94: #{tpu_custom_call.1} parent=67 // pred_check_branch
          %552 = sbr.rel (%p550) target = $region96
        $region95: #{tpu_custom_call.1} parent=67 // pred_region
          %554 = dma.done [#allocation12], 512
        $region96: #{tpu_custom_call.1} parent=67 // pred_fallthru
          _
        // Predicated region
        $region97: #{tpu_custom_call.1} parent=67 // pred_check
          %p555 = pneg %p283
        $region98: #{tpu_custom_call.1} parent=67 // pred_check_branch
          %557 = sbr.rel (%p555) target = $region100
        $region99: #{tpu_custom_call.1} parent=67 // pred_region
          %559 = dma.done [#allocation15], 512
        $region100: #{tpu_custom_call.1} parent=67 // pred_fallthru
          _
        %s560 = sand.u32 %s45, 1
        %s561 = scalar_lea.sflag [#allocation3], %s560
        %s562 = sand.u32 %s45, 1
        %s563 = smul.addr %s562, 8
        %s564 = scalar_lea.vmem [#allocation2], %s563
        %p565 = pneg %p58
        %p566 = pneg %p55
        %s567 = sand.u32 %s37, 1
        %s568 = scalar_lea.sflag [#allocation6], %s567
        %s569 = sand.u32 %s71, 1
        %s570 = smul.addr %s569, 8
        %s571 = scalar_lea.vmem [#allocation5], %s570
        %p572 = pneg %p84
        %p573 = pneg %p81
        %s574 = sand.u32 %s37, 1
        %s575 = scalar_lea.sflag [#allocation6], %s574
        %s576 = sand.u32 %s97, 1
        %s577 = smul.addr %s576, 8
        %s578 = scalar_lea.vmem [#allocation7], %s577
        %p579 = pneg %p110
        %p580 = pneg %p107
        %s581 = sand.u32 %s37, 1
        %s582 = scalar_lea.sflag [#allocation9], %s581
        %s583 = sand.u32 %s123, 1
        %s584 = smul.addr %s583, 8
        %s585 = scalar_lea.vmem [#allocation8], %s584
        %p586 = pneg %p136
        %p587 = pneg %p133
        %p588 = pneg %p157
        %p589 = pneg %p154
        %p590 = pneg %p178
        %p591 = pneg %p175
        %p592 = pneg %p199
        %p593 = pneg %p196
        %p594 = pneg %p220
        %p595 = pneg %p217
        %p596 = pneg %p241
        %p597 = pneg %p238
        %p598 = pneg %p262
        %p599 = pneg %p259
        %p600 = pneg %p283
        %p601 = pneg %p280
        %p602 = pneg %p304
        %p603 = pneg %p301
        %p604 = pneg %p330
        %p605 = pneg %p327
        %s606 = sand.u32 %s317, 1
        %s607 = scalar_lea.sflag [#allocation4], %s606
        %s608 = sand.u32 %s317, 1
        %s609 = smul.addr %s608, 8
        %s610 = scalar_lea.vmem [#allocation16], %s609
        %v611 = vld [vmem:[%s504] sm:$0xff]
        %v612 = vld [vmem:[%s514] sm:$0xff]
        %v613 = vld [vmem:[%s524] sm:$0xff]
        %v614 = vld [vmem:[%s534] sm:$0xff]
        %vm615 = vcmp.eq.f32.partialorder %v614, 0.0
        %v616 = vld [vmem:[#allocation10] sm:$0xff]
        %v617 = vld [vmem:[#allocation10 + $0x8] sm:$0xff]
        %v618 = vld [vmem:[#allocation10 + $0x10] sm:$0xff]
        %v619 = vld [vmem:[#allocation10 + $0x18] sm:$0xff]
        %v620 = vld [vmem:[%s5] sm:$0x1]
        %v622 = vperm.slane %v620, 0
        %vm624 = vcmask 261120
        %v626 = vsel %vm624, %v611, 0
        %628 = vmatpush.msra.mxu0 0.0
        %629 = vmatpush.msra.mxu0 0.0
        %630 = vmatpush.msra.mxu0 0.0
        %631 = vmatpush.msra.mxu0 0.0
        %632 = vmatpush.msra.mxu0 0.0
        %633 = vmatpush.msra.mxu0 0.0
        %634 = vmatpush.msra.mxu0 0.0
        %635 = vmatpush.msra.mxu0 0.0
        %636 = vmatpush.msra.mxu0 0.0
        %637 = vmatpush.msra.mxu0 0.0
        %638 = vmatpush.msra.mxu0 0.0
        %639 = vmatpush.msra.mxu0 0.0
        %640 = vmatpush.msra.mxu0 %v619
        %641 = vmatpush.msra.mxu0 %v618
        %642 = vmatpush.msra.mxu0 %v617
        %643 = vmatpush.msra.mxu0 %v616
        %644 = vmatmul.f32.gmra.mxu0 %v626
        %v645 = vpop.f32.mrf.mxu0
        %v646 = vadd.f32 %v622, %v645
        %647 = vdwg.mxu0
        %v648 = vld [vmem:[#allocation11] sm:$0xff]
        %v649 = vld [vmem:[#allocation11 + $0x8] sm:$0xff]
        %v650 = vld [vmem:[#allocation11 + $0x10] sm:$0xff]
        %v651 = vld [vmem:[#allocation11 + $0x18] sm:$0xff]
        %v652 = vld [vmem:[%s7] sm:$0x1]
        %v654 = vperm.slane %v652, 0
        %v657 = vsel %vm624, %v612, 0
        %659 = vmatpush.msra.mxu0 0.0
        %660 = vmatpush.msra.mxu0 0.0
        %661 = vmatpush.msra.mxu0 0.0
        %662 = vmatpush.msra.mxu0 0.0
        %663 = vmatpush.msra.mxu0 0.0
        %664 = vmatpush.msra.mxu0 0.0
        %665 = vmatpush.msra.mxu0 0.0
        %666 = vmatpush.msra.mxu0 0.0
        %667 = vmatpush.msra.mxu0 0.0
        %668 = vmatpush.msra.mxu0 0.0
        %669 = vmatpush.msra.mxu0 0.0
        %670 = vmatpush.msra.mxu0 0.0
        %671 = vmatpush.msra.mxu0 %v651
        %672 = vmatpush.msra.mxu0 %v650
        %673 = vmatpush.msra.mxu0 %v649
        %674 = vmatpush.msra.mxu0 %v648
        %675 = vmatmul.f32.gmra.mxu0 %v657
        %v676 = vpop.f32.mrf.mxu0
        %v677 = vadd.f32 %v654, %v676
        %678 = vdwg.mxu0
        %v679 = vld [vmem:[#allocation13] sm:$0xff]
        %v680 = vld [vmem:[#allocation13 + $0x8] sm:$0xff]
        %v681 = vld [vmem:[#allocation13 + $0x10] sm:$0xff]
        %v682 = vld [vmem:[#allocation13 + $0x18] sm:$0xff]
        %v683 = vld [vmem:[%s9] sm:$0x1]
        %v685 = vperm.slane %v683, 0
        %v688 = vsel %vm624, %v613, 0
        %690 = vmatpush.msra.mxu0 0.0
        %691 = vmatpush.msra.mxu0 0.0
        %692 = vmatpush.msra.mxu0 0.0
        %693 = vmatpush.msra.mxu0 0.0
        %694 = vmatpush.msra.mxu0 0.0
        %695 = vmatpush.msra.mxu0 0.0
        %696 = vmatpush.msra.mxu0 0.0
        %697 = vmatpush.msra.mxu0 0.0
        %698 = vmatpush.msra.mxu0 0.0
        %699 = vmatpush.msra.mxu0 0.0
        %700 = vmatpush.msra.mxu0 0.0
        %701 = vmatpush.msra.mxu0 0.0
        %702 = vmatpush.msra.mxu0 %v682
        %703 = vmatpush.msra.mxu0 %v681
        %704 = vmatpush.msra.mxu0 %v680
        %705 = vmatpush.msra.mxu0 %v679
        %706 = vmatmul.f32.gmra.mxu0 %v688
        %v707 = vpop.f32.mrf.mxu0
        %v708 = vadd.f32 %v685, %v707
        %709 = vdwg.mxu0
        %vm710 = vcmask 64512
        %v712 = vsel %vm710, %v646, 0
        %v715 = vsel %vm710, %v677, 0
        %717 = vmatpush.xpose.msra.mxu0 0.0
        %718 = vmatpush.xpose.msra.mxu0 0.0
        %719 = vmatpush.xpose.msra.mxu0 0.0
        %720 = vmatpush.xpose.msra.mxu0 0.0
        %721 = vmatpush.xpose.msra.mxu0 0.0
        %722 = vmatpush.xpose.msra.mxu0 0.0
        %723 = vmatpush.xpose.msra.mxu0 0.0
        %724 = vmatpush.xpose.msra.mxu0 0.0
        %725 = vmatpush.xpose.msra.mxu0 0.0
        %726 = vmatpush.xpose.msra.mxu0 0.0
        %727 = vmatpush.xpose.msra.mxu0 0.0
        %728 = vmatpush.xpose.msra.mxu0 0.0
        %729 = vmatpush.xpose.msra.mxu0 0.0
        %730 = vmatpush.xpose.msra.mxu0 0.0
        %731 = vmatpush.xpose.msra.mxu0 0.0
        %732 = vmatpush.xpose.msra.mxu0 %v715
        %733 = vmatmul.f32.gmra.mxu0 %v712
        %v734 = vpop.f32.mrf.mxu0
        %v735 = vadd.f32 0.0, %v734
        %736 = vdwg.mxu0
        %v737 = vmul.f32 %v735, 0.35355338
        %v738 = vsel %vm615, -1e+09, %v737
        %v739 = vsel %vm710, %v738, -inf
        %740 = vmax.xlane.f32.xlu0 %v739
        %v741 = vpop.xlane.xlu0 %740
        %v742 = vsub.f32 %v738, %v741
        %v743 = vmul.f32 %v742, 1.442695
        %v744 = vpow.pop %v743
        %v745 = vsel %vm710, %v744, 0.0
        %746 = vadd.xlane.f32.xlu0 %v745
        %v747 = vpop.xlane.xlu0 %746
        %v748 = vrcp.pop %v747
        %v749 = vmul.f32 %v747, %v748
        %v750 = vsub.f32 1.0, %v749
        %v751 = vmul.f32 %v748, %v750
        %v752 = vadd.f32 %v748, %v751
        %vm753 = vweird.f32 %v747
        %vm754 = vweird.f32 %v748
        %vm755 = vmor %vm753, %vm754
        %v756 = vsel %vm755, %v748, %v752
        %v757 = vand.u32 2147483647, %v747
        %vm758 = vcmp.eq.f32.partialorder %v757, 8.507059e+37
        %v759 = vand.u32 %v747, 2147483648
        %v760 = vor.u32 1.1754944e-38, %v759
        %v761 = vsel %vm758, %v760, %v756
        %v762 = vmul.f32 %v744, %v761
        %v764 = vsel %vm710, %v762, 0
        %766 = vmatpush.msra.mxu0 0.0
        %767 = vmatpush.msra.mxu0 0.0
        %768 = vmatpush.msra.mxu0 0.0
        %769 = vmatpush.msra.mxu0 0.0
        %770 = vmatpush.msra.mxu0 0.0
        %771 = vmatpush.msra.mxu0 0.0
        %772 = vmatpush.msra.mxu0 0.0
        %773 = vmatpush.msra.mxu0 0.0
        %774 = vmatpush.msra.mxu0 0.0
        %775 = vmatpush.msra.mxu0 0.0
        %776 = vmatpush.msra.mxu0 0.0
        %777 = vmatpush.msra.mxu0 0.0
        %778 = vmatpush.msra.mxu0 0.0
        %779 = vmatpush.msra.mxu0 0.0
        %780 = vmatpush.msra.mxu0 0.0
        %781 = vmatpush.msra.mxu0 %v708
        %782 = vmatmul.f32.gmra.mxu0 %v764
        %v783 = vpop.f32.mrf.mxu0
        %v784 = vadd.f32 0.0, %v783
        %785 = vdwg.mxu0
        %786 = vrot.lane.b32.xlu0 %v646, 120
        %v787 = vpop.permute.xlu0 %786
        %788 = vrot.lane.b32.xlu0 %v677, 120
        %v789 = vpop.permute.xlu0 %788
        %v790 = vsel %vm710, %v787, 0
        %v792 = vsel %vm710, %v789, 0
        %794 = vmatpush.xpose.msra.mxu0 0.0
        %795 = vmatpush.xpose.msra.mxu0 0.0
        %796 = vmatpush.xpose.msra.mxu0 0.0
        %797 = vmatpush.xpose.msra.mxu0 0.0
        %798 = vmatpush.xpose.msra.mxu0 0.0
        %799 = vmatpush.xpose.msra.mxu0 0.0
        %800 = vmatpush.xpose.msra.mxu0 0.0
        %801 = vmatpush.xpose.msra.mxu0 0.0
        %802 = vmatpush.xpose.msra.mxu0 0.0
        %803 = vmatpush.xpose.msra.mxu0 0.0
        %804 = vmatpush.xpose.msra.mxu0 0.0
        %805 = vmatpush.xpose.msra.mxu0 0.0
        %806 = vmatpush.xpose.msra.mxu0 0.0
        %807 = vmatpush.xpose.msra.mxu0 0.0
        %808 = vmatpush.xpose.msra.mxu0 0.0
        %809 = vmatpush.xpose.msra.mxu0 %v792
        %810 = vmatmul.f32.gmra.mxu0 %v790
        %v811 = vpop.f32.mrf.mxu0
        %v812 = vadd.f32 0.0, %v811
        %813 = vdwg.mxu0
        %v814 = vmul.f32 %v812, 0.35355338
        %v815 = vsel %vm615, -1e+09, %v814
        %v816 = vsel %vm710, %v815, -inf
        %817 = vmax.xlane.f32.xlu0 %v816
        %v818 = vpop.xlane.xlu0 %817
        %v819 = vsub.f32 %v815, %v818
        %v820 = vmul.f32 %v819, 1.442695
        %v821 = vpow.pop %v820
        %v822 = vsel %vm710, %v821, 0.0
        %823 = vadd.xlane.f32.xlu0 %v822
        %v824 = vpop.xlane.xlu0 %823
        %v825 = vrcp.pop %v824
        %v826 = vmul.f32 %v824, %v825
        %v827 = vsub.f32 1.0, %v826
        %v828 = vmul.f32 %v825, %v827
        %v829 = vadd.f32 %v825, %v828
        %vm830 = vweird.f32 %v824
        %vm831 = vweird.f32 %v825
        %vm832 = vmor %vm830, %vm831
        %v833 = vsel %vm832, %v825, %v829
        %v834 = vand.u32 2147483647, %v824
        %vm835 = vcmp.eq.f32.partialorder %v834, 8.507059e+37
        %v836 = vand.u32 %v824, 2147483648
        %v837 = vor.u32 1.1754944e-38, %v836
        %v838 = vsel %vm835, %v837, %v833
        %v839 = vmul.f32 %v821, %v838
        %841 = vrot.lane.b32.xlu0 %v708, 120
        %v842 = vpop.permute.xlu0 %841
        %v845 = vsel %vm710, %v839, 0
        %847 = vmatpush.msra.mxu0 0.0
        %848 = vmatpush.msra.mxu0 0.0
        %849 = vmatpush.msra.mxu0 0.0
        %850 = vmatpush.msra.mxu0 0.0
        %851 = vmatpush.msra.mxu0 0.0
        %852 = vmatpush.msra.mxu0 0.0
        %853 = vmatpush.msra.mxu0 0.0
        %854 = vmatpush.msra.mxu0 0.0
        %855 = vmatpush.msra.mxu0 0.0
        %856 = vmatpush.msra.mxu0 0.0
        %857 = vmatpush.msra.mxu0 0.0
        %858 = vmatpush.msra.mxu0 0.0
        %859 = vmatpush.msra.mxu0 0.0
        %860 = vmatpush.msra.mxu0 0.0
        %861 = vmatpush.msra.mxu0 0.0
        %862 = vmatpush.msra.mxu0 %v842
        %863 = vmatmul.f32.gmra.mxu0 %v845
        %v864 = vpop.f32.mrf.mxu0
        %v865 = vadd.f32 0.0, %v864
        %866 = vdwg.mxu0
        %867 = vrot.lane.b32.xlu0 %v646, 112
        %v868 = vpop.permute.xlu0 %867
        %869 = vrot.lane.b32.xlu0 %v677, 112
        %v870 = vpop.permute.xlu0 %869
        %v871 = vsel %vm710, %v868, 0
        %v873 = vsel %vm710, %v870, 0
        %875 = vmatpush.xpose.msra.mxu0 0.0
        %876 = vmatpush.xpose.msra.mxu0 0.0
        %877 = vmatpush.xpose.msra.mxu0 0.0
        %878 = vmatpush.xpose.msra.mxu0 0.0
        %879 = vmatpush.xpose.msra.mxu0 0.0
        %880 = vmatpush.xpose.msra.mxu0 0.0
        %881 = vmatpush.xpose.msra.mxu0 0.0
        %882 = vmatpush.xpose.msra.mxu0 0.0
        %883 = vmatpush.xpose.msra.mxu0 0.0
        %884 = vmatpush.xpose.msra.mxu0 0.0
        %885 = vmatpush.xpose.msra.mxu0 0.0
        %886 = vmatpush.xpose.msra.mxu0 0.0
        %887 = vmatpush.xpose.msra.mxu0 0.0
        %888 = vmatpush.xpose.msra.mxu0 0.0
        %889 = vmatpush.xpose.msra.mxu0 0.0
        %890 = vmatpush.xpose.msra.mxu0 %v873
        %891 = vmatmul.f32.gmra.mxu0 %v871
        %v892 = vpop.f32.mrf.mxu0
        %v893 = vadd.f32 0.0, %v892
        %894 = vdwg.mxu0
        %v895 = vmul.f32 %v893, 0.35355338
        %v896 = vsel %vm615, -1e+09, %v895
        %v897 = vsel %vm710, %v896, -inf
        %898 = vmax.xlane.f32.xlu0 %v897
        %v899 = vpop.xlane.xlu0 %898
        %v900 = vsub.f32 %v896, %v899
        %v901 = vmul.f32 %v900, 1.442695
        %v902 = vpow.pop %v901
        %v903 = vsel %vm710, %v902, 0.0
        %904 = vadd.xlane.f32.xlu0 %v903
        %v905 = vpop.xlane.xlu0 %904
        %v906 = vrcp.pop %v905
        %v907 = vmul.f32 %v905, %v906
        %v908 = vsub.f32 1.0, %v907
        %v909 = vmul.f32 %v906, %v908
        %v910 = vadd.f32 %v906, %v909
        %vm911 = vweird.f32 %v905
        %vm912 = vweird.f32 %v906
        %vm913 = vmor %vm911, %vm912
        %v914 = vsel %vm913, %v906, %v910
        %v915 = vand.u32 2147483647, %v905
        %vm916 = vcmp.eq.f32.partialorder %v915, 8.507059e+37
        %v917 = vand.u32 %v905, 2147483648
        %v918 = vor.u32 1.1754944e-38, %v917
        %v919 = vsel %vm916, %v918, %v914
        %v920 = vmul.f32 %v902, %v919
        %921 = vrot.lane.b32.xlu0 %v708, 112
        %v922 = vpop.permute.xlu0 %921
        %v925 = vsel %vm710, %v920, 0
        %927 = vmatpush.msra.mxu0 0.0
        %928 = vmatpush.msra.mxu0 0.0
        %929 = vmatpush.msra.mxu0 0.0
        %930 = vmatpush.msra.mxu0 0.0
        %931 = vmatpush.msra.mxu0 0.0
        %932 = vmatpush.msra.mxu0 0.0
        %933 = vmatpush.msra.mxu0 0.0
        %934 = vmatpush.msra.mxu0 0.0
        %935 = vmatpush.msra.mxu0 0.0
        %936 = vmatpush.msra.mxu0 0.0
        %937 = vmatpush.msra.mxu0 0.0
        %938 = vmatpush.msra.mxu0 0.0
        %939 = vmatpush.msra.mxu0 0.0
        %940 = vmatpush.msra.mxu0 0.0
        %941 = vmatpush.msra.mxu0 0.0
        %942 = vmatpush.msra.mxu0 %v922
        %943 = vmatmul.f32.gmra.mxu0 %v925
        %v944 = vpop.f32.mrf.mxu0
        %v945 = vadd.f32 0.0, %v944
        %946 = vdwg.mxu0
        %947 = vrot.lane.b32.xlu0 %v646, 104
        %v948 = vpop.permute.xlu0 %947
        %949 = vrot.lane.b32.xlu0 %v677, 104
        %v950 = vpop.permute.xlu0 %949
        %v951 = vsel %vm710, %v948, 0
        %v953 = vsel %vm710, %v950, 0
        %955 = vmatpush.xpose.msra.mxu0 0.0
        %956 = vmatpush.xpose.msra.mxu0 0.0
        %957 = vmatpush.xpose.msra.mxu0 0.0
        %958 = vmatpush.xpose.msra.mxu0 0.0
        %959 = vmatpush.xpose.msra.mxu0 0.0
        %960 = vmatpush.xpose.msra.mxu0 0.0
        %961 = vmatpush.xpose.msra.mxu0 0.0
        %962 = vmatpush.xpose.msra.mxu0 0.0
        %963 = vmatpush.xpose.msra.mxu0 0.0
        %964 = vmatpush.xpose.msra.mxu0 0.0
        %965 = vmatpush.xpose.msra.mxu0 0.0
        %966 = vmatpush.xpose.msra.mxu0 0.0
        %967 = vmatpush.xpose.msra.mxu0 0.0
        %968 = vmatpush.xpose.msra.mxu0 0.0
        %969 = vmatpush.xpose.msra.mxu0 0.0
        %970 = vmatpush.xpose.msra.mxu0 %v953
        %971 = vmatmul.f32.gmra.mxu0 %v951
        %v972 = vpop.f32.mrf.mxu0
        %v973 = vadd.f32 0.0, %v972
        %974 = vdwg.mxu0
        %v975 = vmul.f32 %v973, 0.35355338
        %v976 = vsel %vm615, -1e+09, %v975
        %v977 = vsel %vm710, %v976, -inf
        %978 = vmax.xlane.f32.xlu0 %v977
        %v979 = vpop.xlane.xlu0 %978
        %v980 = vsub.f32 %v976, %v979
        %v981 = vmul.f32 %v980, 1.442695
        %v982 = vpow.pop %v981
        %v983 = vsel %vm710, %v982, 0.0
        %984 = vadd.xlane.f32.xlu0 %v983
        %v985 = vpop.xlane.xlu0 %984
        %v986 = vrcp.pop %v985
        %v987 = vmul.f32 %v985, %v986
        %v988 = vsub.f32 1.0, %v987
        %v989 = vmul.f32 %v986, %v988
        %v990 = vadd.f32 %v986, %v989
        %vm991 = vweird.f32 %v985
        %vm992 = vweird.f32 %v986
        %vm993 = vmor %vm991, %vm992
        %v994 = vsel %vm993, %v986, %v990
        %v995 = vand.u32 2147483647, %v985
        %vm996 = vcmp.eq.f32.partialorder %v995, 8.507059e+37
        %v997 = vand.u32 %v985, 2147483648
        %v998 = vor.u32 1.1754944e-38, %v997
        %v999 = vsel %vm996, %v998, %v994
        %v1000 = vmul.f32 %v982, %v999
        %1001 = vrot.lane.b32.xlu0 %v708, 104
        %v1002 = vpop.permute.xlu0 %1001
        %v1005 = vsel %vm710, %v1000, 0
        %1007 = vmatpush.msra.mxu0 0.0
        %1008 = vmatpush.msra.mxu0 0.0
        %1009 = vmatpush.msra.mxu0 0.0
        %1010 = vmatpush.msra.mxu0 0.0
        %1011 = vmatpush.msra.mxu0 0.0
        %1012 = vmatpush.msra.mxu0 0.0
        %1013 = vmatpush.msra.mxu0 0.0
        %1014 = vmatpush.msra.mxu0 0.0
        %1015 = vmatpush.msra.mxu0 0.0
        %1016 = vmatpush.msra.mxu0 0.0
        %1017 = vmatpush.msra.mxu0 0.0
        %1018 = vmatpush.msra.mxu0 0.0
        %1019 = vmatpush.msra.mxu0 0.0
        %1020 = vmatpush.msra.mxu0 0.0
        %1021 = vmatpush.msra.mxu0 0.0
        %1022 = vmatpush.msra.mxu0 %v1002
        %1023 = vmatmul.f32.gmra.mxu0 %v1005
        %v1024 = vpop.f32.mrf.mxu0
        %v1025 = vadd.f32 0.0, %v1024
        %1026 = vdwg.mxu0
        %1028 = vrot.lane.b32.xlu0 %v865, 8
        %v1029 = vpop.permute.xlu0 %1028
        %1032 = vrot.lane.b32.xlu0 %v945, 16
        %v1033 = vpop.permute.xlu0 %1032
        %1036 = vrot.lane.b32.xlu0 %v1025, 24
        %v1037 = vpop.permute.xlu0 %1036
        %v1039 = vsel %vm710, %v784, %v1029
        %vm1040 = vcmask 130048
        %v1041 = vsel %vm1040, %v1039, %v1033
        %vm1042 = vcmask 195584
        %v1043 = vsel %vm1042, %v1041, %v1037
        %v1044 = vld [vmem:[#allocation14] sm:$0xff]
        %v1045 = vld [vmem:[#allocation14 + $0x8] sm:$0xff]
        %v1046 = vld [vmem:[#allocation14 + $0x10] sm:$0xff]
        %v1047 = vld [vmem:[#allocation14 + $0x18] sm:$0xff]
        %v1048 = vld [vmem:[%s11] sm:$0x1]
        %v1050 = vperm.slane %v1048, 0
        %v1053 = vsel %vm624, %v1043, 0
        %1055 = vmatpush.msra.mxu0 0.0
        %1056 = vmatpush.msra.mxu0 0.0
        %1057 = vmatpush.msra.mxu0 0.0
        %1058 = vmatpush.msra.mxu0 0.0
        %1059 = vmatpush.msra.mxu0 0.0
        %1060 = vmatpush.msra.mxu0 0.0
        %1061 = vmatpush.msra.mxu0 0.0
        %1062 = vmatpush.msra.mxu0 0.0
        %1063 = vmatpush.msra.mxu0 0.0
        %1064 = vmatpush.msra.mxu0 0.0
        %1065 = vmatpush.msra.mxu0 0.0
        %1066 = vmatpush.msra.mxu0 0.0
        %1067 = vmatpush.msra.mxu0 %v1047
        %1068 = vmatpush.msra.mxu0 %v1046
        %1069 = vmatpush.msra.mxu0 %v1045
        %1070 = vmatpush.msra.mxu0 %v1044
        %1071 = vmatmul.f32.gmra.mxu0 %v1053
        %v1072 = vpop.f32.mrf.mxu0
        %v1073 = vadd.f32 %v1050, %v1072
        %1074 = vdwg.mxu0
        %1075 = vst.msk [vmem:[%s610] sm:$0xff] %vm624, %v1073
        %s1076 = sand.u32 %s317, 1
        %s1077 = scalar_lea.sflag [#allocation4], %s1076
        %s1078 = sand.u32 %s317, 1
        %s1079 = smul.addr %s1078, 8
        %s1080 = scalar_lea.vmem [#allocation16], %s1079
        // Predicated region
        $region101: #{tpu_custom_call.1} parent=67 // pred_check
          %p1081 = pneg %p327
        $region102: #{tpu_custom_call.1} parent=67 // pred_check_branch
          %1083 = sbr.rel (%p1081) target = $region104
        $region103: #{tpu_custom_call.1} parent=67 // pred_region
          %1085 = vsyncadd %s1077, 0
          %s1086 = smul.addr %s37, 8
          %s1087 = scalar_lea.hbm %s12, %s1086
          %s1089 = sshll.u32 %s1080, 4
          %s1090 = int_to_ptr.vmem [resolvable:$true] %s1089
          %s1091 = sshll.u32 %s1087, 4
          %s1092 = int_to_ptr.hbm [resolvable:$true] %s1091
          %1094 = dma.vmem_to_hbm [thread:$0]  %s1090, 128, %s1092, %s1077
        $region104: #{tpu_custom_call.1} parent=67 // pred_fallthru
          _
      $region68: #{tpu_custom_call.1} parent=5 // pred_fallthru
        _
      %p1095 = scmp.le.s32.totalorder 2, %s32
      // Predicated region
      $region105: #{tpu_custom_call.1} parent=5 // pred_check
        %p1096 = pneg %p1095
      $region106: #{tpu_custom_call.1} parent=5 // pred_check_branch
        %1098 = sbr.rel (%p1096) target = $region108
      $region107: #{tpu_custom_call.1} parent=5 // pred_region
        %s1099 = ssub.s32 %s32, 2
        // Predicated region
        $region109: #{tpu_custom_call.1} parent=107 // pred_check
          %p1100 = pneg %p333
        $region110: #{tpu_custom_call.1} parent=107 // pred_check_branch
          %1102 = sbr.rel (%p1100) target = $region112
        $region111: #{tpu_custom_call.1} parent=107 // pred_region
          %s1103 = sand.u32 %s318, 1
          %s1104 = scalar_lea.sflag [#allocation4], %s1103
          %s1105 = sand.u32 %s318, 1
          %s1106 = smul.addr %s1105, 8
          %s1107 = scalar_lea.vmem [#allocation16], %s1106
          %1109 = dma.done %s1104, 128
        $region112: #{tpu_custom_call.1} parent=107 // pred_fallthru
          _
      $region108: #{tpu_custom_call.1} parent=5 // pred_fallthru
        _
    $region6: #{tpu_custom_call.1} parent=1 // loop_footer
      %s36 = sadd.s32 1, %s32
    $region7: #{tpu_custom_call.1} parent=1 // loop_footer_branch
      %31 = sbr.rel target = $region3
    $region8: #{tpu_custom_call.1} parent=1 // loop_exit
      _
    %1110 = vsyncpa [#allocation3], 1
    %s1111 = scalar_lea.sflag [#allocation3], 1
    %1112 = vsyncpa %s1111, 1
    %1113 = vsyncpa [#allocation6], 1
    %s1114 = scalar_lea.sflag [#allocation6], 1
    %1115 = vsyncpa %s1114, 1
    %1116 = vsyncpa [#allocation9], 1
    %s1117 = scalar_lea.sflag [#allocation9], 1
    %1118 = vsyncpa %s1117, 1
    %1119 = vsyncpa [#allocation12], 1
    %1120 = vsyncpa [#allocation15], 1
    %1121 = vsyncpa [#allocation4], 1
    %s1122 = scalar_lea.sflag [#allocation4], 1
    %1123 = vsyncpa %s1122, 1

</llo_original>
